<compile_context>
chip_gen: v6e
topology: v6e:2x2x1
jax: 0.10.0
libtpu: 0.0.40
codegen_flags: <defaults>
</compile_context>

<pallas_src>
import functools

import jax
import jax.numpy as jnp
from jax import lax
from jax.experimental import pallas as pl
from jax.experimental.pallas import tpu as pltpu


def _running_minmax_kernel(momentum, m_total, s_blk, ragged,
                           cur_min_ref, cur_max_ref, x_ref,
                           out_min_ref, out_max_ref,
                           min_acc, max_acc):
    j = pl.program_id(0)
    nm = pl.num_programs(0)

    @pl.when(j == 0)
    def _init():
        min_acc[...] = jnp.full_like(min_acc, jnp.inf)
        max_acc[...] = jnp.full_like(max_acc, -jnp.inf)

    def _accumulate(valid_rows):
        xb = x_ref[...]                                   # (R, s_blk, 128), native dtype
        if valid_rows is None:
            xb_min = xb_max = xb
        else:
            # Ragged last block along M: rows >= valid_rows hold garbage -> neutralize.
            rows = lax.broadcasted_iota(jnp.int32, xb.shape, 1)
            keep = rows < valid_rows
            xb_min = jnp.where(keep, xb, jnp.inf)
            xb_max = jnp.where(keep, xb, -jnp.inf)
        # Full-width VPU elementwise accumulate (no per-step XLU reduction).
        min_acc[...] = jnp.minimum(min_acc[...], xb_min)
        max_acc[...] = jnp.maximum(max_acc[...], xb_max)

    if ragged:
        @pl.when(j < nm - 1)
        def _full_block():
            _accumulate(None)

        @pl.when(j == nm - 1)
        def _tail_block():
            _accumulate(m_total - j * s_blk)
    else:
        _accumulate(None)

    @pl.when(j == nm - 1)
    def _finalize():
        # One-time cross-sublane + cross-lane reduction, then EMA in f32.
        x_min = min_acc[...].min(axis=1).min(axis=1, keepdims=True).astype(jnp.float32)
        x_max = max_acc[...].max(axis=1).max(axis=1, keepdims=True).astype(jnp.float32)
        cur_min = cur_min_ref[...]
        cur_max = cur_max_ref[...]
        uninit = jnp.any(jnp.isinf(cur_min))      # mirrors current_xmin.isinf().any()
        m = jnp.float32(momentum)
        out_min_ref[...] = jnp.where(uninit, x_min, (1.0 - m) * x_min + m * cur_min)
        out_max_ref[...] = jnp.where(uninit, x_max, (1.0 - m) * x_max + m * cur_max)


def running_minmax(cur_min, cur_max, x2d, momentum, *,
                   target_block_bytes=4 * 1024 * 1024):
    """cur_min/cur_max: (R, 1) float32 running state.  x2d: (R, N) in native dtype.

    Returns the updated (new_min, new_max), each (R, 1) float32.
    """
    R, N = x2d.shape
    if not jnp.issubdtype(x2d.dtype, jnp.floating):
        # TODO(synk): integer inputs take an upcast copy; a dtype-specific init
        # value would avoid it.
        x2d = x2d.astype(jnp.float32)

    LANES = 128
    if N % LANES != 0:
        # TODO(synk): rare ragged-lane case pays one edge-replicating pad copy; could be
        # folded into the kernel with a lane-index mask on the last 128-wide column.
        pad = LANES - N % LANES
        x2d = jnp.pad(x2d, ((0, 0), (0, pad)), mode="edge")
        N += pad
    M = N // LANES
    x3 = x2d.reshape(R, M, LANES)                 # contiguous reshape -> no copy

    itemsize = x3.dtype.itemsize
    s_target = max(8, target_block_bytes // (R * LANES * itemsize))
    if M <= s_target:
        s_blk = M                                  # single block (full-dim block is legal)
    else:
        s_blk = max(8, (min(s_target, M) // 8) * 8)
    grid_m = pl.cdiv(M, s_blk)
    ragged = (M % s_blk) != 0

    # TODO(synk): on v7x (2 TensorCores) a leading "parallel" grid axis splitting M
    # (with a tiny follow-up combine) would use the second core; kept single-core
    # here to keep the EMA fused into the kernel.
    # TODO(synk): very large leading dims (R * 8 * 128 * itemsize >> VMEM budget)
    # would need an R grid axis as well.

    kernel = functools.partial(_running_minmax_kernel, float(momentum), M, s_blk, ragged)
    out_shape = (jax.ShapeDtypeStruct((R, 1), jnp.float32),
                 jax.ShapeDtypeStruct((R, 1), jnp.float32))

    return pl.pallas_call(
        kernel,
        out_shape=out_shape,
        grid_spec=pltpu.PrefetchScalarGridSpec(
            num_scalar_prefetch=0,
            grid=(grid_m,),
            in_specs=[
                pl.BlockSpec((R, 1), lambda j: (0, 0)),                # current_xmin
                pl.BlockSpec((R, 1), lambda j: (0, 0)),                # current_xmax
                pl.BlockSpec((R, s_blk, LANES), lambda j: (0, j, 0)),  # x tile
            ],
            out_specs=[
                pl.BlockSpec((R, 1), lambda j: (0, 0)),
                pl.BlockSpec((R, 1), lambda j: (0, 0)),
            ],
            scratch_shapes=[
                pltpu.VMEM((R, s_blk, LANES), x3.dtype),   # running block-min
                pltpu.VMEM((R, s_blk, LANES), x3.dtype),   # running block-max
            ],
        ),
        compiler_params=pltpu.CompilerParams(
            dimension_semantics=("arbitrary",),
            vmem_limit_bytes=32 * 1024 * 1024,
        ),
        cost_estimate=pl.CostEstimate(
            flops=2 * x3.size,
            transcendentals=0,
            bytes_accessed=x3.size * itemsize + 4 * R * 4,
        ),
    )(cur_min.astype(jnp.float32), cur_max.astype(jnp.float32), x3)


class RunningMinMaxEstimator:
    """JAX/Pallas port of the PyTorch RunningMinMaxEstimator forward pass."""

    def __init__(self, momentum=0.9, per_channel=False,
                 target_block_bytes=4 * 1024 * 1024):
        self.momentum = momentum
        self.per_channel = per_channel
        self.target_block_bytes = target_block_bytes
        # Lazy buffers (PyTorch UninitializedBuffer analogue) kept as host-side state.
        self.current_xmin = None
        self.current_xmax = None

    def __call__(self, x):
        x = jnp.asarray(x)
        if self.per_channel:
            x2d = x.reshape(x.shape[0], -1)
        else:
            x2d = x.reshape(1, -1)
        R = x2d.shape[0]

        if self.current_xmin is None:
            # initialize_parameters: buffers start at +/- inf so the kernel takes
            # the "first observation" branch.
            cur_min = jnp.full((R, 1), jnp.inf, jnp.float32)
            cur_max = jnp.full((R, 1), -jnp.inf, jnp.float32)
        else:
            cur_min = jnp.asarray(self.current_xmin, jnp.float32).reshape(R, 1)
            cur_max = jnp.asarray(self.current_xmax, jnp.float32).reshape(R, 1)

        new_min, new_max = running_minmax(
            cur_min, cur_max, x2d, self.momentum,
            target_block_bytes=self.target_block_bytes)

        if self.per_channel:
            self.current_xmin = new_min.reshape(R)
            self.current_xmax = new_max.reshape(R)
        else:
            self.current_xmin = new_min.reshape(())
            self.current_xmax = new_max.reshape(())
        return self.current_xmin, self.current_xmax


def _reference_step(x, cur_min, cur_max, momentum, per_channel):
    if per_channel:
        xf = x.reshape(x.shape[0], -1)
        x_min = xf.min(axis=-1).astype(jnp.float32)
        x_max = xf.max(axis=-1).astype(jnp.float32)
    else:
        x_min = x.min().astype(jnp.float32)
        x_max = x.max().astype(jnp.float32)
    if cur_min is None or bool(jnp.any(jnp.isinf(cur_min))):
        return x_min, x_max
    return ((1 - momentum) * x_min + momentum * cur_min,
            (1 - momentum) * x_max + momentum * cur_max)


if __name__ == "__main__":
    key = jax.random.PRNGKey(0)
    k1, k2, k3, k4 = jax.random.split(key, 4)

    def check(a, b, atol=1e-6):
        return bool(jnp.allclose(jnp.asarray(a, jnp.float32),
                                 jnp.asarray(b, jnp.float32), atol=atol))

    ok = True

    # --- case 1: NCHW f32 activations, both per_channel modes, init + EMA steps. ---
    x1 = jax.random.normal(k1, (2, 4, 16, 16), jnp.float32)
    x2 = jax.random.normal(k2, (2, 4, 16, 16), jnp.float32) * 2.0 + 0.5
    for per_channel in (False, True):
        est = RunningMinMaxEstimator(momentum=0.9, per_channel=per_channel)
        mn1, mx1 = est(x1)
        jax.block_until_ready((mn1, mx1))
        r_mn1, r_mx1 = _reference_step(x1, None, None, 0.9, per_channel)
        mn2, mx2 = est(x2)
        jax.block_until_ready((mn2, mx2))
        r_mn2, r_mx2 = _reference_step(x2, r_mn1, r_mx1, 0.9, per_channel)
        ok &= check(mn1, r_mn1) and check(mx1, r_mx1)
        ok &= check(mn2, r_mn2) and check(mx2, r_mx2)

    # --- case 2: bf16 activations streamed in native dtype (no f32 upcast copy). ---
    xb1 = (jax.random.normal(k3, (2, 4, 16, 16), jnp.float32) * 3.0).astype(jnp.bfloat16)
    xb2 = (jax.random.normal(k4, (2, 4, 16, 16), jnp.float32) - 1.0).astype(jnp.bfloat16)
    est = RunningMinMaxEstimator(momentum=0.9, per_channel=True)
    mn1, mx1 = est(xb1)
    jax.block_until_ready((mn1, mx1))
    r_mn1, r_mx1 = _reference_step(xb1, None, None, 0.9, True)
    mn2, mx2 = est(xb2)
    jax.block_until_ready((mn2, mx2))
    r_mn2, r_mx2 = _reference_step(xb2, r_mn1, r_mx1, 0.9, True)
    ok &= check(mn1, r_mn1) and check(mx1, r_mx1)
    ok &= check(mn2, r_mn2) and check(mx2, r_mx2)

    # --- case 3: multi-block grid + ragged last block along M (in-kernel masking). ---
    # per-channel rows have N = 4*8*52 = 1664 = 13*128 -> M=13; a tiny block budget
    # forces S_blk=8, grid=2, with 5 valid rows in the last (partially OOB) block.
    x5 = jax.random.normal(k1, (3, 4, 8, 52), jnp.float32)
    x6 = jax.random.normal(k2, (3, 4, 8, 52), jnp.float32) * 0.5 - 2.0
    est = RunningMinMaxEstimator(momentum=0.9, per_channel=True,
                                 target_block_bytes=8 * 3 * 128 * 4)
    mn1, mx1 = est(x5)
    jax.block_until_ready((mn1, mx1))
    r_mn1, r_mx1 = _reference_step(x5, None, None, 0.9, True)
    mn2, mx2 = est(x6)
    jax.block_until_ready((mn2, mx2))
    r_mn2, r_mx2 = _reference_step(x6, r_mn1, r_mx1, 0.9, True)
    ok &= check(mn1, r_mn1) and check(mx1, r_mx1)
    ok &= check(mn2, r_mn2) and check(mx2, r_mx2)

    # --- case 4: feature count not a multiple of 128 (rare pad fallback path). ---
    x7 = jax.random.normal(k3, (2, 3, 5, 7), jnp.float32)
    est = RunningMinMaxEstimator(momentum=0.9, per_channel=False)
    mn1, mx1 = est(x7)
    jax.block_until_ready((mn1, mx1))
    r_mn1, r_mx1 = _reference_step(x7, None, None, 0.9, False)
    ok &= check(mn1, r_mn1) and check(mx1, r_mx1)

    if ok:
        print("KERNEL_OK")
    else:
        raise SystemExit("mismatch vs reference")
</pallas_src>

<mosaic_0001>
module attributes {stable_mosaic.version = 11 : i64} {
  func.func @_running_minmax_kernel(%arg0: i32, %arg1: memref<1x1xf32, #tpu.memory_space<vmem>>, %arg2: memref<1x1xf32, #tpu.memory_space<vmem>>, %arg3: memref<1x16x128xf32, #tpu.memory_space<vmem>>, %arg4: memref<1x1xf32, #tpu.memory_space<vmem>>, %arg5: memref<1x1xf32, #tpu.memory_space<vmem>>, %arg6: memref<1x16x128xf32, #tpu.memory_space<vmem>>, %arg7: memref<1x16x128xf32, #tpu.memory_space<vmem>>) attributes {dimension_semantics = [#tpu.dimension_semantics<arbitrary>], iteration_bounds = array<i64: 1>, scalar_prefetch = 0 : i64, scratch_operands = 2 : i64, tpu.core_type = #tpu.core_type<tc>, window_params = [{pipeline_mode = #tpu.pipeline_mode<synchronous>, transform_indices = @transform_0, window_bounds = array<i64: 1, 1>}, {pipeline_mode = #tpu.pipeline_mode<synchronous>, transform_indices = @transform_1, window_bounds = array<i64: 1, 1>}, {transform_indices = @transform_2, window_bounds = array<i64: 1, 16, 128>}, {pipeline_mode = #tpu.pipeline_mode<synchronous>, transform_indices = @transform_3, window_bounds = array<i64: 1, 1>}, {pipeline_mode = #tpu.pipeline_mode<synchronous>, transform_indices = @transform_4, window_bounds = array<i64: 1, 1>}]} {
    %c0_i32 = arith.constant 0 : i32
    %0 = arith.cmpi eq, %arg0, %c0_i32 : i32
    %1 = arith.extui %0 : i1 to i32
    %c0_i32_0 = arith.constant 0 : i32
    %2 = arith.cmpi ne, %1, %c0_i32_0 : i32
    scf.if %2 {
      %cst = arith.constant 0x7F800000 : f32
      %13 = vector.broadcast %cst : f32 to vector<1x16x128xf32>
      %c0_17 = arith.constant 0 : index
      %c0_18 = arith.constant 0 : index
      %c0_19 = arith.constant 0 : index
      %14 = vector.load %arg6[%c0_17, %c0_18, %c0_19] : memref<1x16x128xf32, #tpu.memory_space<vmem>>, vector<1x16x128xf32>
      tpu.vector_store %arg6[%c0_17, %c0_18, %c0_19], %13 {strides = array<i32>} : memref<1x16x128xf32, #tpu.memory_space<vmem>>, vector<1x16x128xf32>,
      %cst_20 = arith.constant 0xFF800000 : f32
      %15 = vector.broadcast %cst_20 : f32 to vector<1x16x128xf32>
      %c0_21 = arith.constant 0 : index
      %c0_22 = arith.constant 0 : index
      %c0_23 = arith.constant 0 : index
      %16 = vector.load %arg7[%c0_21, %c0_22, %c0_23] : memref<1x16x128xf32, #tpu.memory_space<vmem>>, vector<1x16x128xf32>
      tpu.vector_store %arg7[%c0_21, %c0_22, %c0_23], %15 {strides = array<i32>} : memref<1x16x128xf32, #tpu.memory_space<vmem>>, vector<1x16x128xf32>,
    } else {
    }
    %c0 = arith.constant 0 : index
    %c0_1 = arith.constant 0 : index
    %c0_2 = arith.constant 0 : index
    %3 = vector.load %arg3[%c0, %c0_1, %c0_2] : memref<1x16x128xf32, #tpu.memory_space<vmem>>, vector<1x16x128xf32>
    %c0_3 = arith.constant 0 : index
    %c0_4 = arith.constant 0 : index
    %c0_5 = arith.constant 0 : index
    %4 = vector.load %arg6[%c0_3, %c0_4, %c0_5] : memref<1x16x128xf32, #tpu.memory_space<vmem>>, vector<1x16x128xf32>
    %5 = arith.minimumf %4, %3 : vector<1x16x128xf32>
    %c0_6 = arith.constant 0 : index
    %c0_7 = arith.constant 0 : index
    %c0_8 = arith.constant 0 : index
    %6 = vector.load %arg6[%c0_6, %c0_7, %c0_8] : memref<1x16x128xf32, #tpu.memory_space<vmem>>, vector<1x16x128xf32>
    tpu.vector_store %arg6[%c0_6, %c0_7, %c0_8], %5 {strides = array<i32>} : memref<1x16x128xf32, #tpu.memory_space<vmem>>, vector<1x16x128xf32>,
    %c0_9 = arith.constant 0 : index
    %c0_10 = arith.constant 0 : index
    %c0_11 = arith.constant 0 : index
    %7 = vector.load %arg7[%c0_9, %c0_10, %c0_11] : memref<1x16x128xf32, #tpu.memory_space<vmem>>, vector<1x16x128xf32>
    %8 = arith.maximumf %7, %3 : vector<1x16x128xf32>
    %c0_12 = arith.constant 0 : index
    %c0_13 = arith.constant 0 : index
    %c0_14 = arith.constant 0 : index
    %9 = vector.load %arg7[%c0_12, %c0_13, %c0_14] : memref<1x16x128xf32, #tpu.memory_space<vmem>>, vector<1x16x128xf32>
    tpu.vector_store %arg7[%c0_12, %c0_13, %c0_14], %8 {strides = array<i32>} : memref<1x16x128xf32, #tpu.memory_space<vmem>>, vector<1x16x128xf32>,
    %c0_i32_15 = arith.constant 0 : i32
    %10 = arith.cmpi eq, %arg0, %c0_i32_15 : i32
    %11 = arith.extui %10 : i1 to i32
    %c0_i32_16 = arith.constant 0 : i32
    %12 = arith.cmpi ne, %11, %c0_i32_16 : i32
    scf.if %12 {
      %c0_17 = arith.constant 0 : index
      %c0_18 = arith.constant 0 : index
      %c0_19 = arith.constant 0 : index
      %13 = vector.load %arg6[%c0_17, %c0_18, %c0_19] : memref<1x16x128xf32, #tpu.memory_space<vmem>>, vector<1x16x128xf32>
      %cst = arith.constant dense<0x7F800000> : vector<1x128xf32>
      %14 = vector.multi_reduction <minimumf>, %13, %cst [1] : vector<1x16x128xf32> to vector<1x128xf32>
      %cst_20 = arith.constant dense<0x7F800000> : vector<1xf32>
      %15 = vector.multi_reduction <minimumf>, %14, %cst_20 [1] : vector<1x128xf32> to vector<1xf32>
      %16 = vector.shape_cast %15 : vector<1xf32> to vector<1x1xf32>
      %c0_21 = arith.constant 0 : index
      %c0_22 = arith.constant 0 : index
      %c0_23 = arith.constant 0 : index
      %17 = vector.load %arg7[%c0_21, %c0_22, %c0_23] : memref<1x16x128xf32, #tpu.memory_space<vmem>>, vector<1x16x128xf32>
      %cst_24 = arith.constant dense<0xFF800000> : vector<1x128xf32>
      %18 = vector.multi_reduction <maximumf>, %17, %cst_24 [1] : vector<1x16x128xf32> to vector<1x128xf32>
      %cst_25 = arith.constant dense<0xFF800000> : vector<1xf32>
      %19 = vector.multi_reduction <maximumf>, %18, %cst_25 [1] : vector<1x128xf32> to vector<1xf32>
      %20 = vector.shape_cast %19 : vector<1xf32> to vector<1x1xf32>
      %c0_26 = arith.constant 0 : index
      %c0_27 = arith.constant 0 : index
      %21 = vector.load %arg1[%c0_26, %c0_27] : memref<1x1xf32, #tpu.memory_space<vmem>>, vector<1x1xf32>
      %c0_28 = arith.constant 0 : index
      %c0_29 = arith.constant 0 : index
      %22 = vector.load %arg2[%c0_28, %c0_29] : memref<1x1xf32, #tpu.memory_space<vmem>>, vector<1x1xf32>
      %23 = math.absf %21 : vector<1x1xf32>
      %cst_30 = arith.constant 0x7F800000 : f32
      %24 = vector.broadcast %cst_30 : f32 to vector<1x1xf32>
      %25 = arith.cmpf oeq, %23, %24 : vector<1x1xf32>
      %cst_31 = arith.constant 1.000000e+00 : f32
      %cst_32 = arith.constant 0.000000e+00 : f32
      %26 = vector.broadcast %cst_31 : f32 to vector<1x1xf32>
      %27 = vector.broadcast %cst_32 : f32 to vector<1x1xf32>
      %28 = arith.select %25, %26, %27 : vector<1x1xi1>, vector<1x1xf32>
      %29 = vector.shape_cast %28 : vector<1x1xf32> to vector<1x1x1xf32>
      %cst_33 = arith.constant dense<0xFF800000> : vector<1xf32>
      %30 = vector.multi_reduction <maximumf>, %29, %cst_33 [1, 2] : vector<1x1x1xf32> to vector<1xf32>
      %31 = vector.shape_cast %30 : vector<1xf32> to vector<1x1x1xf32>
      %32 = vector.extract %31[0, 0, 0] : f32 from vector<1x1x1xf32>
      %cst_34 = arith.constant 0.000000e+00 : f32
      %33 = arith.cmpf ogt, %32, %cst_34 : f32
      %cst_35 = arith.constant 1.000000e+00 : f32
      %cst_36 = arith.constant 0.899999976 : f32
      %34 = arith.subf %cst_35, %cst_36 : f32
      %35 = vector.broadcast %34 : f32 to vector<1x1xf32>
      %36 = arith.mulf %35, %16 : vector<1x1xf32>
      %cst_37 = arith.constant 0.899999976 : f32
      %37 = vector.broadcast %cst_37 : f32 to vector<1x1xf32>
      %38 = arith.mulf %37, %21 : vector<1x1xf32>
      %39 = arith.addf %36, %38 : vector<1x1xf32>
      %40 = arith.select %33, %16, %39 : vector<1x1xf32>
      %c0_38 = arith.constant 0 : index
      %c0_39 = arith.constant 0 : index
      %41 = vector.load %arg4[%c0_38, %c0_39] : memref<1x1xf32, #tpu.memory_space<vmem>>, vector<1x1xf32>
      tpu.vector_store %arg4[%c0_38, %c0_39], %40 {strides = array<i32>} : memref<1x1xf32, #tpu.memory_space<vmem>>, vector<1x1xf32>,
      %cst_40 = arith.constant 1.000000e+00 : f32
      %cst_41 = arith.constant 0.899999976 : f32
      %42 = arith.subf %cst_40, %cst_41 : f32
      %43 = vector.broadcast %42 : f32 to vector<1x1xf32>
      %44 = arith.mulf %43, %20 : vector<1x1xf32>
      %cst_42 = arith.constant 0.899999976 : f32
      %45 = vector.broadcast %cst_42 : f32 to vector<1x1xf32>
      %46 = arith.mulf %45, %22 : vector<1x1xf32>
      %47 = arith.addf %44, %46 : vector<1x1xf32>
      %48 = arith.select %33, %20, %47 : vector<1x1xf32>
      %c0_43 = arith.constant 0 : index
      %c0_44 = arith.constant 0 : index
      %49 = vector.load %arg5[%c0_43, %c0_44] : memref<1x1xf32, #tpu.memory_space<vmem>>, vector<1x1xf32>
      tpu.vector_store %arg5[%c0_43, %c0_44], %48 {strides = array<i32>} : memref<1x1xf32, #tpu.memory_space<vmem>>, vector<1x1xf32>,
    } else {
    }
    return
  }
  func.func @transform_0(%arg0: i32) -> (i32, i32) {
    %c0_i32 = arith.constant 0 : i32
    %c0_i32_0 = arith.constant 0 : i32
    %c0_i32_1 = arith.constant 0 : i32
    return %c0_i32, %c0_i32_0 : i32, i32
  }
  func.func @transform_1(%arg0: i32) -> (i32, i32) {
    %c0_i32 = arith.constant 0 : i32
    %c0_i32_0 = arith.constant 0 : i32
    %c0_i32_1 = arith.constant 0 : i32
    return %c0_i32, %c0_i32_0 : i32, i32
  }
  func.func @transform_2(%arg0: i32) -> (i32, i32, i32) {
    %c0_i32 = arith.constant 0 : i32
    %c0_i32_0 = arith.constant 0 : i32
    %c0_i32_1 = arith.constant 0 : i32
    return %c0_i32, %arg0, %c0_i32_0 : i32, i32, i32
  }
  func.func @transform_3(%arg0: i32) -> (i32, i32) {
    %c0_i32 = arith.constant 0 : i32
    %c0_i32_0 = arith.constant 0 : i32
    %c0_i32_1 = arith.constant 0 : i32
    return %c0_i32, %c0_i32_0 : i32, i32
  }
  func.func @transform_4(%arg0: i32) -> (i32, i32) {
    %c0_i32 = arith.constant 0 : i32
    %c0_i32_0 = arith.constant 0 : i32
    %c0_i32_1 = arith.constant 0 : i32
    return %c0_i32, %c0_i32_0 : i32, i32
  }
}

</mosaic_0001>

<llo_original>
// kernel: tpu_custom_call.1
$region0: #{tpu_custom_call.1}
  #allocation0 [shape = 'u32[]', space=smem, size = 0x4, offset = 0x4, fixed_abs, tag = 'smem constant byte address 0x4 - core index']
  #allocation1 [shape = 'u32[144,128]{1,0:T(1,128)}', space=vmem, size = 0x12000, scoped, tag = 'internal scratch']
  #allocation2 [shape = 'f32[1,16,128]{2,1,0:T(8,128)}', space=vmem, size = 0x2000, scoped, tag = 'scratch operand']
  #allocation3 [shape = 'f32[1,16,128]{2,1,0:T(8,128)}', space=vmem, size = 0x2000, scoped, tag = 'scratch operand']
  #allocation4 [shape = 'f32[1,1]{1,0:T(1,128)S(1)}', space=vmem, size = 0x200, scoped, tag = 'scoped memory for tpu_custom_call.1']
  #allocation5 [shape = 'f32[1,1]{1,0:T(1,128)S(1)}', space=vmem, size = 0x200, scoped, tag = 'scoped memory for tpu_custom_call.1']
  %s0 = inlined_call_operand.<no memory space> [shape: f32[1,1], index: 0, kind: input, shape index: {}]
  %s1 = inlined_call_operand.<no memory space> [shape: f32[1,1], index: 1, kind: input, shape index: {}]
  %s2 = inlined_call_operand.hbm [shape: f32[1,16,128], index: 2, kind: input, shape index: {}]
  %s3 = inlined_call_operand.hbm [shape: f32[1,1], index: 3, kind: output, shape index: {0}]
  %s4 = inlined_call_operand.hbm [shape: f32[1,1], index: 4, kind: output, shape index: {1}]
  %5 = xla_tuple %s3, %s4
  %s6 = sld [smem:[#allocation0]]
  $region42: #{tpu_custom_call.1} parent=0
    _
  %s8 = ssub.s32 1, %s6
  %s9 = scalar_select 0, %s8, %s6
  %v10 = vstv %s0
  %11 = vst [vmem:[#allocation4] sm:$0x1] %v10
  %v12 = vstv %s1
  %13 = vst [vmem:[#allocation5] sm:$0x1] %v12
  $region1: #{tpu_custom_call.1} parent=0
    #allocation6 [shape = 'u8[8192]{0}', space=vmem, size = 0x2000, scoped, tag = 'input window, operand 2, single buffered']
    #allocation7 [shape = 's32[1]{0}', space=sflag, size = 0x4, scoped, tag = 'scoped memory for tpu_custom_call.1']
    #allocation8 [shape = 's32[1]{0}', space=sflag, size = 0x4, scoped, tag = 'scoped memory for tpu_custom_call.1']
    #allocation9 [shape = 'u8[512]{0}', space=vmem, size = 0x400, scoped, tag = 'output window, operand 0, single buffered']
    #allocation10 [shape = 'u8[512]{0}', space=vmem, size = 0x400, scoped, tag = 'output window, operand 1, single buffered']
    #allocation11 [shape = 's32[1]{0}', space=sflag, size = 0x4, scoped, tag = 'scoped memory for tpu_custom_call.1']
    %14 = vsyncpa [#allocation7], 0
    %15 = vsyncpa [#allocation8], 0
    %16 = vsyncpa [#allocation11], 0
    // Predicated region
    $region2: #{tpu_custom_call.1} parent=1 // pred_check
      _
    $region3: #{tpu_custom_call.1} parent=1 // pred_check_branch
      %18 = sbr.rel (0) target = $region5
    $region4: #{tpu_custom_call.1} parent=1 // pred_region
      _
    $region5: #{tpu_custom_call.1} parent=1 // pred_fallthru
      _
    // Predicated region
    $region6: #{tpu_custom_call.1} parent=1 // pred_check
      _
    $region7: #{tpu_custom_call.1} parent=1 // pred_check_branch
      %20 = sbr.rel (0) target = $region9
    $region8: #{tpu_custom_call.1} parent=1 // pred_region
      _
    $region9: #{tpu_custom_call.1} parent=1 // pred_fallthru
      _
    // Predicated region
    $region10: #{tpu_custom_call.1} parent=1 // pred_check
      _
    $region11: #{tpu_custom_call.1} parent=1 // pred_check_branch
      %22 = sbr.rel (0) target = $region13
    $region12: #{tpu_custom_call.1} parent=1 // pred_region
      %s24 = ssub.s32 256, 256
      %25 = vsyncadd [#allocation7], %s24
      %s26 = sshll.u32 [#allocation6], 4
      %s27 = int_to_ptr.vmem [resolvable:$true] %s26
      %32 = dma.hbm_to_vmem [thread:$0]  %s2, 256, %s27, [#allocation7], 128, 128, 8
    $region13: #{tpu_custom_call.1} parent=1 // pred_fallthru
      _
    // Predicated region
    $region14: #{tpu_custom_call.1} parent=1 // pred_check
      _
    $region15: #{tpu_custom_call.1} parent=1 // pred_check_branch
      %34 = sbr.rel (0) target = $region17
    $region16: #{tpu_custom_call.1} parent=1 // pred_region
      %35 = dma.done [#allocation7], 256
    $region17: #{tpu_custom_call.1} parent=1 // pred_fallthru
      _
    %p36 = scmp.eq.s32.totalorder 0, 0
    // Predicated region
    $region18: #{tpu_custom_call.1} parent=1 // pred_check
      %p37 = pneg %p36
    $region19: #{tpu_custom_call.1} parent=1 // pred_check_branch
      %39 = sbr.rel (%p37) target = $region21
    $region20: #{tpu_custom_call.1} parent=1 // pred_region
      %40 = vst [vmem:[#allocation2] sm:$0xff] inf
      %41 = vst [vmem:[#allocation2 + $0x8] sm:$0xff] inf
      %42 = vst [vmem:[#allocation3] sm:$0xff] -inf
      %43 = vst [vmem:[#allocation3 + $0x8] sm:$0xff] -inf
    $region21: #{tpu_custom_call.1} parent=1 // pred_fallthru
      _
    %v44 = vld [vmem:[#allocation6] sm:$0xff]
    %v45 = vld [vmem:[#allocation6 + $0x8] sm:$0xff]
    %v46 = vld [vmem:[#allocation2] sm:$0xff]
    %v47 = vld [vmem:[#allocation2 + $0x8] sm:$0xff]
    %v48 = vmin.f32 %v46, %v44
    %v49 = vmin.f32 %v47, %v45
    %50 = vst [vmem:[#allocation2] sm:$0xff] %v48
    %51 = vst [vmem:[#allocation2 + $0x8] sm:$0xff] %v49
    %v52 = vld [vmem:[#allocation3] sm:$0xff]
    %v53 = vld [vmem:[#allocation3 + $0x8] sm:$0xff]
    %v54 = vmax.f32 %v52, %v44
    %v55 = vmax.f32 %v53, %v45
    %56 = vst [vmem:[#allocation3] sm:$0xff] %v54
    %57 = vst [vmem:[#allocation3 + $0x8] sm:$0xff] %v55
    // Predicated region
    $region22: #{tpu_custom_call.1} parent=1 // pred_check
      %p58 = pneg %p36
    $region23: #{tpu_custom_call.1} parent=1 // pred_check_branch
      %60 = sbr.rel (%p58) target = $region25
    $region24: #{tpu_custom_call.1} parent=1 // pred_region
      %v61 = vld [vmem:[#allocation2] sm:$0xff]
      %v62 = vld [vmem:[#allocation2 + $0x8] sm:$0xff]
      %v63 = vmin.f32 %v61, %v62
      %v64 = vrot.slane %v63, 4
      %v65 = vmin.f32 %v63, %v64
      %v66 = vrot.slane %v65, 2
      %v67 = vmin.f32 %v65, %v66
      %v68 = vrot.slane %v67, 1
      %v69 = vmin.f32 %v67, %v68
      %70 = vmin.xlane.f32.xlu0 %v69
      %v71 = vpop.xlane.xlu0 %70
      %v72 = vld [vmem:[#allocation3] sm:$0xff]
      %v73 = vld [vmem:[#allocation3 + $0x8] sm:$0xff]
      %v74 = vmax.f32 %v72, %v73
      %v75 = vrot.slane %v74, 4
      %v76 = vmax.f32 %v74, %v75
      %v77 = vrot.slane %v76, 2
      %v78 = vmax.f32 %v76, %v77
      %v79 = vrot.slane %v78, 1
      %v80 = vmax.f32 %v78, %v79
      %81 = vmax.xlane.f32.xlu0 %v80
      %v82 = vpop.xlane.xlu0 %81
      %v83 = vld [vmem:[#allocation4] sm:$0x1]
      %v84 = vld [vmem:[#allocation5] sm:$0x1]
      %v85 = vand.u32 2147483647, %v83
      %vm86 = vcmp.eq.f32.partialorder %v85, inf
      %v87 = vsel %vm86, 1.0, 0.0
      %s88 = vtos %v87
      %p89 = scmp.gt.f32.partialorder %s88, 0.0
      %v90 = vmul.f32 %v71, 0.100000024
      %v91 = vmul.f32 %v83, 0.9
      %v92 = vadd.f32 %v90, %v91
      %s93 = scalar_select %p89, 1, 0
      %v94 = vstv %s93
      %vm95 = vcmp.eq.s32.totalorder %v94, 1
      %v96 = vsel %vm95, %v71, %v92
      %vm97 = vcmask 0
      %98 = vst.msk [vmem:[#allocation9] sm:$0x1] %vm97, %v96
      %v99 = vmul.f32 %v82, 0.100000024
      %v100 = vmul.f32 %v84, 0.9
      %v101 = vadd.f32 %v99, %v100
      %v102 = vsel %vm95, %v82, %v101
      %103 = vst.msk [vmem:[#allocation10] sm:$0x1] %vm97, %v102
    $region25: #{tpu_custom_call.1} parent=1 // pred_fallthru
      _
    // Predicated region
    $region26: #{tpu_custom_call.1} parent=1 // pred_check
      _
    $region27: #{tpu_custom_call.1} parent=1 // pred_check_branch
      %105 = sbr.rel (0) target = $region29
    $region28: #{tpu_custom_call.1} parent=1 // pred_region
      %s107 = ssub.s32 16, 16
      %108 = vsyncadd [#allocation8], %s107
      %s110 = sshll.u32 [#allocation9], 4
      %s111 = int_to_ptr.vmem [resolvable:$true] %s110
      %113 = dma.vmem_to_hbm [thread:$0]  %s111, 16, %s3, [#allocation8]
    $region29: #{tpu_custom_call.1} parent=1 // pred_fallthru
      _
    // Predicated region
    $region30: #{tpu_custom_call.1} parent=1 // pred_check
      _
    $region31: #{tpu_custom_call.1} parent=1 // pred_check_branch
      %115 = sbr.rel (0) target = $region33
    $region32: #{tpu_custom_call.1} parent=1 // pred_region
      %s117 = ssub.s32 16, 16
      %118 = vsyncadd [#allocation11], %s117
      %s120 = sshll.u32 [#allocation10], 4
      %s121 = int_to_ptr.vmem [resolvable:$true] %s120
      %123 = dma.vmem_to_hbm [thread:$0]  %s121, 16, %s4, [#allocation11]
    $region33: #{tpu_custom_call.1} parent=1 // pred_fallthru
      _
    // Predicated region
    $region34: #{tpu_custom_call.1} parent=1 // pred_check
      _
    $region35: #{tpu_custom_call.1} parent=1 // pred_check_branch
      %125 = sbr.rel (0) target = $region37
    $region36: #{tpu_custom_call.1} parent=1 // pred_region
      %126 = dma.done [#allocation8], 16
    $region37: #{tpu_custom_call.1} parent=1 // pred_fallthru
      _
    // Predicated region
    $region38: #{tpu_custom_call.1} parent=1 // pred_check
      _
    $region39: #{tpu_custom_call.1} parent=1 // pred_check_branch
      %128 = sbr.rel (0) target = $region41
    $region40: #{tpu_custom_call.1} parent=1 // pred_region
      %129 = dma.done [#allocation11], 16
    $region41: #{tpu_custom_call.1} parent=1 // pred_fallthru
      _
    %130 = vsyncpa [#allocation7], 1
    %131 = vsyncpa [#allocation8], 1
    %132 = vsyncpa [#allocation11], 1

</llo_original>
